<compile_context>
chip_gen: v7x
topology: tpu7x:2x2x1
jax: 0.10.0
libtpu: 0.0.40
codegen_flags: <defaults>
</compile_context>

<pallas_src>
import functools

import jax
import jax.numpy as jnp
from jax.experimental import pallas as pl
from jax.experimental.pallas import tpu as pltpu


def _round_up(x, m):
    return ((x + m - 1) // m) * m


def _choose_tb(batch, requested):
    # Batch tile: as close to the MXU height (128/256) as the batch allows,
    # always a multiple of 8 sublanes.  Keep >= 2 grid steps when the batch is
    # big enough so the second v7x TensorCore is not idle.
    tb = max(8, min(_round_up(requested, 8), _round_up(batch, 8)))
    while tb > 8 and _round_up(batch, tb) // tb < 2:
        tb = max(8, ((tb // 2) // 8) * 8)
    return tb


def cbow_kernel(ids_ref, table_ref, out_ref, acc_ref, *, inv_s, vchunk,
                compute_dtype):
    # One (batch-tile i, vocab-chunk k) grid step.
    #   ids_ref:   (TB, S)       int32          token ids (fetched once per i)
    #   table_ref: (Vchunk, Dp)  compute_dtype  one vocab chunk of the table
    #   out_ref:   (TB, Dp)      out dtype      written at the last chunk
    #   acc_ref:   (TB, Dp)      f32            accumulator across vocab chunks
    k = pl.program_id(1)

    @pl.when(k == 0)
    def _():
        acc_ref[...] = jnp.zeros_like(acc_ref)

    ids = ids_ref[...]
    tb, s_len = ids.shape

    # counts[b, v] = #occurrences of global vocab id (k*Vchunk + v) in row b.
    # Static unroll over S: each step is one lane-broadcast compare + add on a
    # (TB, Vchunk) tile — pure VPU work, hidden under the table-chunk DMA and
    # the MXU matmul.  For very long sequences this should become a
    # lax.fori_loop over S-chunks to bound code size / live ranges.
    v_iota = jax.lax.broadcasted_iota(jnp.int32, (tb, vchunk), 1) + k * vchunk
    counts = jnp.zeros((tb, vchunk), dtype=jnp.float32)
    for s in range(s_len):
        counts = counts + (ids[:, s:s + 1] == v_iota).astype(jnp.float32)

    # (TB, Vchunk) @ (Vchunk, Dp) on the MXU, f32 accumulation, DEFAULT
    # precision (counts are exact small integers -> lossless in bf16).
    acc_ref[...] += jnp.dot(
        counts.astype(compute_dtype),
        table_ref[...],
        preferred_element_type=jnp.float32,
    )

    @pl.when(k == pl.num_programs(1) - 1)
    def _():
        out_ref[...] = (acc_ref[...] * inv_s).astype(out_ref.dtype)


def prepare_cbow_table(emb_table, *, vchunk=512, compute_dtype=jnp.bfloat16):
    """Pad + cast the embedding table ONCE (init time, not per forward call)."""
    V, D = emb_table.shape
    vchunk = min(vchunk, _round_up(V, 128))          # multiple of 128 lanes
    Vp = _round_up(V, vchunk)
    Dp = _round_up(D, 128)
    table = emb_table.astype(compute_dtype)
    if (Vp, Dp) != (V, D):
        table = jnp.pad(table, ((0, Vp - V), (0, Dp - D)))
    return {
        "table": table,
        "vocab_size": V,
        "dim": D,
        "vchunk": vchunk,
        "out_dtype": emb_table.dtype,
    }


def cbow_features(input_ids, prepared, *, tb=256):
    """input_ids: (B, S) int; prepared: output of prepare_cbow_table.

    Equivalent to: emb_table[input_ids].mean(axis=1)  -> (B, D)
    """
    table = prepared["table"]
    V, D = prepared["vocab_size"], prepared["dim"]
    vchunk = prepared["vchunk"]
    out_dtype = prepared["out_dtype"]
    Vp, Dp = table.shape

    B, S = input_ids.shape
    tb = _choose_tb(B, tb)
    Bp = _round_up(B, tb)

    ids = input_ids.astype(jnp.int32)
    if Bp != B:
        # Pad with 0 (a valid index); padded rows are sliced off below.
        ids = jnp.pad(ids, ((0, Bp - B), (0, 0)))

    n_b = Bp // tb
    n_k = Vp // vchunk

    kernel = functools.partial(
        cbow_kernel, inv_s=1.0 / S, vchunk=vchunk, compute_dtype=table.dtype)

    # VMEM budget: double-buffered table chunk + ids/out tiles + f32 accumulator.
    tbytes = jnp.dtype(table.dtype).itemsize
    obytes = jnp.dtype(out_dtype).itemsize
    vmem_bytes = (2 * vchunk * Dp * tbytes
                  + 2 * tb * S * 4
                  + 2 * tb * Dp * obytes
                  + tb * Dp * 4)
    vmem_limit = int(min(max(2 * vmem_bytes, 32 << 20), 64 << 20))

    out = pl.pallas_call(
        kernel,
        out_shape=jax.ShapeDtypeStruct((Bp, Dp), out_dtype),
        grid=(n_b, n_k),
        in_specs=[
            # Ids tile: constant over k -> DMAed once per batch tile.
            pl.BlockSpec((tb, S), lambda i, k: (i, 0)),
            # Table chunks: streamed (double-buffered) along the vocab axis.
            pl.BlockSpec((vchunk, Dp), lambda i, k: (k, 0)),
        ],
        out_specs=pl.BlockSpec((tb, Dp), lambda i, k: (i, 0)),
        scratch_shapes=[pltpu.VMEM((tb, Dp), jnp.float32)],
        compiler_params=pltpu.CompilerParams(
            dimension_semantics=("parallel", "arbitrary"),
            vmem_limit_bytes=vmem_limit,
        ),
    )(ids, table)

    return out[:B, :D]


if __name__ == "__main__":
    # Small deterministic setup consistent with the module:
    #   vocab_size = len(tokenizer) = 32, embeddings_dim = 128 (stand-in for
    #   the 300 default -- the wrapper pads any D to a multiple of 128),
    #   pad_token_id = 0, batch = 2, seq = 8.
    V, D, B, S, PAD = 32, 128, 2, 8, 0

    key = jax.random.PRNGKey(0)
    k_emb, k_ids = jax.random.split(key)

    # nn.Embedding(V, D, padding_idx=PAD): normal init, pad row zeroed.
    emb_table = jax.random.normal(k_emb, (V, D), dtype=jnp.float32)
    emb_table = emb_table.at[PAD].set(0.0)

    # batch['input_ids']: token ids in [0, V), with trailing pad tokens.
    input_ids = jax.random.randint(k_ids, (B, S), 0, V, dtype=jnp.int32)
    input_ids = input_ids.at[:, -2:].set(PAD)

    prepared = prepare_cbow_table(emb_table)          # once, at init time
    out = jax.block_until_ready(cbow_features(input_ids, prepared))
    assert out.shape == (B, D) and out.dtype == emb_table.dtype

    # Reference with the same bf16-quantised table -> tight tolerance on the
    # kernel arithmetic itself.
    table_q = emb_table.astype(jnp.bfloat16).astype(jnp.float32)
    ref_q = jnp.take(table_q, input_ids, axis=0).mean(axis=1)
    assert jnp.allclose(out, ref_q, atol=1e-4, rtol=1e-4)

    # Sanity vs the exact f32 PyTorch-style reference (bf16 table rounding is
    # ~1e-3 relative, so the tolerance is loosened accordingly).
    ref = jnp.take(emb_table, input_ids, axis=0).mean(axis=1)
    assert jnp.allclose(out, ref, atol=2e-2, rtol=2e-2)

    print("KERNEL_OK")
</pallas_src>

<mosaic_0001>
module attributes {stable_mosaic.version = 11 : i64} {
  func.func @cbow_kernel(%arg0: i32, %arg1: i32, %arg2: memref<8x8xi32, #tpu.memory_space<vmem>>, %arg3: memref<128x128xbf16, #tpu.memory_space<vmem>>, %arg4: memref<8x128xf32, #tpu.memory_space<vmem>>, %arg5: memref<8x128xf32, #tpu.memory_space<vmem>>) attributes {dimension_semantics = [#tpu.dimension_semantics<parallel>, #tpu.dimension_semantics<arbitrary>], iteration_bounds = array<i64: 1, 1>, scalar_prefetch = 0 : i64, scratch_operands = 1 : i64, tpu.core_type = #tpu.core_type<tc>, window_params = [{transform_indices = @transform_0, window_bounds = array<i64: 8, 8>}, {transform_indices = @transform_1, window_bounds = array<i64: 128, 128>}, {transform_indices = @transform_2, window_bounds = array<i64: 8, 128>}]} {
    %c0_i32 = arith.constant 0 : i32
    %0 = arith.cmpi eq, %arg1, %c0_i32 : i32
    %1 = arith.extui %0 : i1 to i32
    %c0_i32_0 = arith.constant 0 : i32
    %2 = arith.cmpi ne, %1, %c0_i32_0 : i32
    scf.if %2 {
      %cst_11 = arith.constant 0.000000e+00 : f32
      %66 = vector.broadcast %cst_11 : f32 to vector<8x128xf32>
      %c0_12 = arith.constant 0 : index
      %c0_13 = arith.constant 0 : index
      %67 = vector.load %arg5[%c0_12, %c0_13] : memref<8x128xf32, #tpu.memory_space<vmem>>, vector<8x128xf32>
      tpu.vector_store %arg5[%c0_12, %c0_13], %66 {strides = array<i32>} : memref<8x128xf32, #tpu.memory_space<vmem>>, vector<8x128xf32>,
    } else {
    }
    %c0 = arith.constant 0 : index
    %c0_1 = arith.constant 0 : index
    %3 = vector.load %arg2[%c0, %c0_1] : memref<8x8xi32, #tpu.memory_space<vmem>>, vector<8x8xi32>
    %4 = tpu.iota {dimensions = array<i32: 1>} : vector<8x128xi32>
    %c128_i32 = arith.constant 128 : i32
    %5 = arith.muli %arg1, %c128_i32 : i32
    %6 = vector.broadcast %5 : i32 to vector<8x128xi32>
    %7 = arith.addi %4, %6 : vector<8x128xi32>
    %cst = arith.constant 0.000000e+00 : f32
    %8 = vector.broadcast %cst : f32 to vector<8x128xf32>
    %9 = vector.extract_strided_slice %3 {offsets = [0, 0], sizes = [8, 1], strides = [1, 1]} : vector<8x8xi32> to vector<8x1xi32>
    %10 = vector.broadcast %9 : vector<8x1xi32> to vector<8x128xi32>
    %11 = arith.cmpi eq, %10, %7 : vector<8x128xi32>
    %12 = arith.extui %11 : vector<8x128xi1> to vector<8x128xi32>
    %13 = arith.sitofp %12 : vector<8x128xi32> to vector<8x128xf32>
    %14 = arith.addf %8, %13 : vector<8x128xf32>
    %15 = vector.extract_strided_slice %3 {offsets = [0, 1], sizes = [8, 1], strides = [1, 1]} : vector<8x8xi32> to vector<8x1xi32>
    %16 = vector.broadcast %15 : vector<8x1xi32> to vector<8x128xi32>
    %17 = arith.cmpi eq, %16, %7 : vector<8x128xi32>
    %18 = arith.extui %17 : vector<8x128xi1> to vector<8x128xi32>
    %19 = arith.sitofp %18 : vector<8x128xi32> to vector<8x128xf32>
    %20 = arith.addf %14, %19 : vector<8x128xf32>
    %21 = vector.extract_strided_slice %3 {offsets = [0, 2], sizes = [8, 1], strides = [1, 1]} : vector<8x8xi32> to vector<8x1xi32>
    %22 = vector.broadcast %21 : vector<8x1xi32> to vector<8x128xi32>
    %23 = arith.cmpi eq, %22, %7 : vector<8x128xi32>
    %24 = arith.extui %23 : vector<8x128xi1> to vector<8x128xi32>
    %25 = arith.sitofp %24 : vector<8x128xi32> to vector<8x128xf32>
    %26 = arith.addf %20, %25 : vector<8x128xf32>
    %27 = vector.extract_strided_slice %3 {offsets = [0, 3], sizes = [8, 1], strides = [1, 1]} : vector<8x8xi32> to vector<8x1xi32>
    %28 = vector.broadcast %27 : vector<8x1xi32> to vector<8x128xi32>
    %29 = arith.cmpi eq, %28, %7 : vector<8x128xi32>
    %30 = arith.extui %29 : vector<8x128xi1> to vector<8x128xi32>
    %31 = arith.sitofp %30 : vector<8x128xi32> to vector<8x128xf32>
    %32 = arith.addf %26, %31 : vector<8x128xf32>
    %33 = vector.extract_strided_slice %3 {offsets = [0, 4], sizes = [8, 1], strides = [1, 1]} : vector<8x8xi32> to vector<8x1xi32>
    %34 = vector.broadcast %33 : vector<8x1xi32> to vector<8x128xi32>
    %35 = arith.cmpi eq, %34, %7 : vector<8x128xi32>
    %36 = arith.extui %35 : vector<8x128xi1> to vector<8x128xi32>
    %37 = arith.sitofp %36 : vector<8x128xi32> to vector<8x128xf32>
    %38 = arith.addf %32, %37 : vector<8x128xf32>
    %39 = vector.extract_strided_slice %3 {offsets = [0, 5], sizes = [8, 1], strides = [1, 1]} : vector<8x8xi32> to vector<8x1xi32>
    %40 = vector.broadcast %39 : vector<8x1xi32> to vector<8x128xi32>
    %41 = arith.cmpi eq, %40, %7 : vector<8x128xi32>
    %42 = arith.extui %41 : vector<8x128xi1> to vector<8x128xi32>
    %43 = arith.sitofp %42 : vector<8x128xi32> to vector<8x128xf32>
    %44 = arith.addf %38, %43 : vector<8x128xf32>
    %45 = vector.extract_strided_slice %3 {offsets = [0, 6], sizes = [8, 1], strides = [1, 1]} : vector<8x8xi32> to vector<8x1xi32>
    %46 = vector.broadcast %45 : vector<8x1xi32> to vector<8x128xi32>
    %47 = arith.cmpi eq, %46, %7 : vector<8x128xi32>
    %48 = arith.extui %47 : vector<8x128xi1> to vector<8x128xi32>
    %49 = arith.sitofp %48 : vector<8x128xi32> to vector<8x128xf32>
    %50 = arith.addf %44, %49 : vector<8x128xf32>
    %51 = vector.extract_strided_slice %3 {offsets = [0, 7], sizes = [8, 1], strides = [1, 1]} : vector<8x8xi32> to vector<8x1xi32>
    %52 = vector.broadcast %51 : vector<8x1xi32> to vector<8x128xi32>
    %53 = arith.cmpi eq, %52, %7 : vector<8x128xi32>
    %54 = arith.extui %53 : vector<8x128xi1> to vector<8x128xi32>
    %55 = arith.sitofp %54 : vector<8x128xi32> to vector<8x128xf32>
    %56 = arith.addf %50, %55 : vector<8x128xf32>
    %c0_2 = arith.constant 0 : index
    %c0_3 = arith.constant 0 : index
    %57 = vector.load %arg5[%c0_2, %c0_3] : memref<8x128xf32, #tpu.memory_space<vmem>>, vector<8x128xf32>
    %58 = arith.truncf %56 : vector<8x128xf32> to vector<8x128xbf16>
    %c0_4 = arith.constant 0 : index
    %c0_5 = arith.constant 0 : index
    %59 = vector.load %arg3[%c0_4, %c0_5] : memref<128x128xbf16, #tpu.memory_space<vmem>>, vector<128x128xbf16>
    %cst_6 = arith.constant dense<0.000000e+00> : vector<8x128xf32>
    %60 = tpu.matmul %58, %59, %cst_6 {dimension_numbers = #tpu.dot_dimension_numbers<[1], [0], [0], [1], [0, 0, 1, 1], [], []>} : vector<8x128xbf16>, vector<128x128xbf16>, vector<8x128xf32> -> vector<8x128xf32>
    %61 = arith.addf %57, %60 : vector<8x128xf32>
    %c0_7 = arith.constant 0 : index
    %c0_8 = arith.constant 0 : index
    %62 = vector.load %arg5[%c0_7, %c0_8] : memref<8x128xf32, #tpu.memory_space<vmem>>, vector<8x128xf32>
    tpu.vector_store %arg5[%c0_7, %c0_8], %61 {strides = array<i32>} : memref<8x128xf32, #tpu.memory_space<vmem>>, vector<8x128xf32>,
    %c0_i32_9 = arith.constant 0 : i32
    %63 = arith.cmpi eq, %arg1, %c0_i32_9 : i32
    %64 = arith.extui %63 : i1 to i32
    %c0_i32_10 = arith.constant 0 : i32
    %65 = arith.cmpi ne, %64, %c0_i32_10 : i32
    scf.if %65 {
      %c0_11 = arith.constant 0 : index
      %c0_12 = arith.constant 0 : index
      %66 = vector.load %arg5[%c0_11, %c0_12] : memref<8x128xf32, #tpu.memory_space<vmem>>, vector<8x128xf32>
      %cst_13 = arith.constant 1.250000e-01 : f32
      %67 = vector.broadcast %cst_13 : f32 to vector<8x128xf32>
      %68 = arith.mulf %66, %67 : vector<8x128xf32>
      %c0_14 = arith.constant 0 : index
      %c0_15 = arith.constant 0 : index
      %69 = vector.load %arg4[%c0_14, %c0_15] : memref<8x128xf32, #tpu.memory_space<vmem>>, vector<8x128xf32>
      tpu.vector_store %arg4[%c0_14, %c0_15], %68 {strides = array<i32>} : memref<8x128xf32, #tpu.memory_space<vmem>>, vector<8x128xf32>,
    } else {
    }
    return
  }
  func.func @transform_0(%arg0: i32, %arg1: i32) -> (i32, i32) {
    %c0_i32 = arith.constant 0 : i32
    %c0_i32_0 = arith.constant 0 : i32
    return %arg0, %c0_i32 : i32, i32
  }
  func.func @transform_1(%arg0: i32, %arg1: i32) -> (i32, i32) {
    %c0_i32 = arith.constant 0 : i32
    %c0_i32_0 = arith.constant 0 : i32
    return %arg1, %c0_i32 : i32, i32
  }
  func.func @transform_2(%arg0: i32, %arg1: i32) -> (i32, i32) {
    %c0_i32 = arith.constant 0 : i32
    %c0_i32_0 = arith.constant 0 : i32
    return %arg0, %c0_i32 : i32, i32
  }
}

</mosaic_0001>

<llo_original>
// kernel: tpu_custom_call.1
$region0: #{tpu_custom_call.1}
  #allocation0 [shape = 'u32[]', space=smem, size = 0x4, offset = 0x4, fixed_abs, tag = 'smem constant byte address 0x4 - core index']
  #allocation1 [shape = 'u32[144,128]{1,0:T(1,128)}', space=vmem, size = 0x12000, scoped, tag = 'internal scratch']
  #allocation2 [shape = 'f32[8,128]{1,0:T(8,128)}', space=vmem, size = 0x1000, scoped, tag = 'scratch operand']
  %s0 = inlined_call_operand.hbm [shape: s32[8,8], index: 0, kind: input, shape index: {}]
  %s1 = inlined_call_operand.hbm [shape: bf16[128,128], index: 1, kind: input, shape index: {}]
  %s2 = inlined_call_operand.hbm [shape: f32[8,128], index: 2, kind: output, shape index: {}]
  %s3 = sld [smem:[#allocation0]]
  $region34: #{tpu_custom_call.1} parent=0
    _
  %s5 = ssub.s32 1, %s3
  %s6 = scalar_select 0, %s5, %s3
  $region1: #{tpu_custom_call.1} parent=0
    #allocation3 [shape = 'u8[4096]{0}', space=vmem, size = 0x1000, scoped, tag = 'input window, operand 0, single buffered']
    #allocation4 [shape = 's32[1]{0}', space=sflag, size = 0x4, scoped, tag = 'scoped memory for tpu_custom_call.1']
    #allocation5 [shape = 's32[1]{0}', space=sflag, size = 0x4, scoped, tag = 'scoped memory for tpu_custom_call.1']
    #allocation6 [shape = 'u8[32768]{0}', space=vmem, size = 0x8000, scoped, tag = 'input window, operand 1, single buffered']
    #allocation7 [shape = 's32[1]{0}', space=sflag, size = 0x4, scoped, tag = 'scoped memory for tpu_custom_call.1']
    #allocation8 [shape = 'u8[4096]{0}', space=vmem, size = 0x1000, scoped, tag = 'output window, operand 0, single buffered']
    %7 = vsyncpa [#allocation4], 0
    %8 = vsyncpa [#allocation7], 0
    %9 = vsyncpa [#allocation5], 0
    // Predicated region
    $region2: #{tpu_custom_call.1} parent=1 // pred_check
      _
    $region3: #{tpu_custom_call.1} parent=1 // pred_check_branch
      %11 = sbr.rel (0) target = $region5
    $region4: #{tpu_custom_call.1} parent=1 // pred_region
      %s13 = ssub.s32 128, 128
      %14 = vsyncadd [#allocation4], %s13
      %s16 = sshll.u32 [#allocation3], 4
      %s17 = int_to_ptr.vmem [resolvable:$true] %s16
      %19 = dma.hbm_to_vmem [thread:$0]  %s0, 128, %s17, [#allocation4]
    $region5: #{tpu_custom_call.1} parent=1 // pred_fallthru
      _
    // Predicated region
    $region6: #{tpu_custom_call.1} parent=1 // pred_check
      _
    $region7: #{tpu_custom_call.1} parent=1 // pred_check_branch
      %21 = sbr.rel (0) target = $region9
    $region8: #{tpu_custom_call.1} parent=1 // pred_region
      %s23 = ssub.s32 1024, 1024
      %24 = vsyncadd [#allocation7], %s23
      %s25 = sshll.u32 [#allocation6], 4
      %s26 = int_to_ptr.vmem [resolvable:$true] %s25
      %31 = dma.hbm_to_vmem [thread:$0]  %s1, 1024, %s26, [#allocation7], 64, 64, 4
    $region9: #{tpu_custom_call.1} parent=1 // pred_fallthru
      _
    // Predicated region
    $region10: #{tpu_custom_call.1} parent=1 // pred_check
      _
    $region11: #{tpu_custom_call.1} parent=1 // pred_check_branch
      %33 = sbr.rel (0) target = $region13
    $region12: #{tpu_custom_call.1} parent=1 // pred_region
      %34 = dma.done [#allocation4], 128
    $region13: #{tpu_custom_call.1} parent=1 // pred_fallthru
      _
    // Predicated region
    $region14: #{tpu_custom_call.1} parent=1 // pred_check
      _
    $region15: #{tpu_custom_call.1} parent=1 // pred_check_branch
      %36 = sbr.rel (0) target = $region17
    $region16: #{tpu_custom_call.1} parent=1 // pred_region
      %37 = dma.done [#allocation7], 1024
    $region17: #{tpu_custom_call.1} parent=1 // pred_fallthru
      _
    %p39 = scmp.eq.s32.totalorder 0, 0
    // Predicated region
    $region18: #{tpu_custom_call.1} parent=1 // pred_check
      %p40 = pneg %p39
    $region19: #{tpu_custom_call.1} parent=1 // pred_check_branch
      %42 = sbr.rel (%p40) target = $region21
    $region20: #{tpu_custom_call.1} parent=1 // pred_region
      %43 = vst [vmem:[#allocation2] sm:$0xff] 0.0
    $region21: #{tpu_custom_call.1} parent=1 // pred_fallthru
      _
    %v44 = vld [vmem:[#allocation3] sm:$0xff]
    %v45 = vlaneseq
    %v46 = vand.u32 %v45, 127
    %s47 = smul.u32 0, 128
    %v48 = vstv %s47
    %v49 = vadd.s32 %v46, %v48
    %50 = vset.pattern.permute.xlu0 0
    %51 = vperm.xlu0 %50, %v44
    %v52 = vpop.permute.xlu0 %51
    %vm53 = vcmp.eq.s32.totalorder %v52, %v49
    %v54 = vsel %vm53, 1, 0
    %v55 = vcvt.s32.f32 %v54
    %v56 = vadd.f32 %v55, 0.0
    %57 = vset.pattern.permute.xlu0 1
    %58 = vperm.xlu0 %57, %v44
    %v59 = vpop.permute.xlu0 %58
    %vm60 = vcmp.eq.s32.totalorder %v59, %v49
    %v61 = vsel %vm60, 1, 0
    %v62 = vcvt.s32.f32 %v61
    %v63 = vadd.f32 %v56, %v62
    %64 = vset.pattern.permute.xlu0 2
    %65 = vperm.xlu0 %64, %v44
    %v66 = vpop.permute.xlu0 %65
    %vm67 = vcmp.eq.s32.totalorder %v66, %v49
    %v68 = vsel %vm67, 1, 0
    %v69 = vcvt.s32.f32 %v68
    %v70 = vadd.f32 %v63, %v69
    %71 = vset.pattern.permute.xlu0 3
    %72 = vperm.xlu0 %71, %v44
    %v73 = vpop.permute.xlu0 %72
    %vm74 = vcmp.eq.s32.totalorder %v73, %v49
    %v75 = vsel %vm74, 1, 0
    %v76 = vcvt.s32.f32 %v75
    %v77 = vadd.f32 %v70, %v76
    %78 = vset.pattern.permute.xlu0 4
    %79 = vperm.xlu0 %78, %v44
    %v80 = vpop.permute.xlu0 %79
    %vm81 = vcmp.eq.s32.totalorder %v80, %v49
    %v82 = vsel %vm81, 1, 0
    %v83 = vcvt.s32.f32 %v82
    %v84 = vadd.f32 %v77, %v83
    %85 = vset.pattern.permute.xlu0 5
    %86 = vperm.xlu0 %85, %v44
    %v87 = vpop.permute.xlu0 %86
    %vm88 = vcmp.eq.s32.totalorder %v87, %v49
    %v89 = vsel %vm88, 1, 0
    %v90 = vcvt.s32.f32 %v89
    %v91 = vadd.f32 %v84, %v90
    %92 = vset.pattern.permute.xlu0 6
    %93 = vperm.xlu0 %92, %v44
    %v94 = vpop.permute.xlu0 %93
    %vm95 = vcmp.eq.s32.totalorder %v94, %v49
    %v96 = vsel %vm95, 1, 0
    %v97 = vcvt.s32.f32 %v96
    %v98 = vadd.f32 %v91, %v97
    %99 = vset.pattern.permute.xlu0 7
    %100 = vperm.xlu0 %99, %v44
    %v101 = vpop.permute.xlu0 %100
    %vm102 = vcmp.eq.s32.totalorder %v101, %v49
    %v103 = vsel %vm102, 1, 0
    %v104 = vcvt.s32.f32 %v103
    %v105 = vadd.f32 %v98, %v104
    %v106 = vld [vmem:[#allocation2] sm:$0xff]
    %v107 = vpack.c.bf16 %v105, %v105
    %v108 = vld [vmem:[#allocation6] sm:$0xf]
    %v109 = vld [vmem:[#allocation6 + $0x4] sm:$0xf]
    %v110 = vld [vmem:[#allocation6 + $0x8] sm:$0xf]
    %v111 = vld [vmem:[#allocation6 + $0xc] sm:$0xf]
    %v112 = vld [vmem:[#allocation6 + $0x10] sm:$0xf]
    %v113 = vld [vmem:[#allocation6 + $0x14] sm:$0xf]
    %v114 = vld [vmem:[#allocation6 + $0x18] sm:$0xf]
    %v115 = vld [vmem:[#allocation6 + $0x1c] sm:$0xf]
    %v116 = vld [vmem:[#allocation6 + $0x20] sm:$0xf]
    %v117 = vld [vmem:[#allocation6 + $0x24] sm:$0xf]
    %v118 = vld [vmem:[#allocation6 + $0x28] sm:$0xf]
    %v119 = vld [vmem:[#allocation6 + $0x2c] sm:$0xf]
    %v120 = vld [vmem:[#allocation6 + $0x30] sm:$0xf]
    %v121 = vld [vmem:[#allocation6 + $0x34] sm:$0xf]
    %v122 = vld [vmem:[#allocation6 + $0x38] sm:$0xf]
    %v123 = vld [vmem:[#allocation6 + $0x3c] sm:$0xf]
    %v140 = vunpack.c.l.b16 %v108
    %v141 = vunpack.c.l.b16 %v109
    %v142 = vunpack.c.l.b16 %v110
    %v143 = vunpack.c.l.b16 %v111
    %v144 = vunpack.c.l.b16 %v112
    %v145 = vunpack.c.l.b16 %v113
    %v146 = vunpack.c.l.b16 %v114
    %v147 = vunpack.c.l.b16 %v115
    %v148 = vunpack.c.l.b16 %v116
    %v149 = vunpack.c.l.b16 %v117
    %v150 = vunpack.c.l.b16 %v118
    %v151 = vunpack.c.l.b16 %v119
    %v152 = vunpack.c.l.b16 %v120
    %v153 = vunpack.c.l.b16 %v121
    %v154 = vunpack.c.l.b16 %v122
    %v155 = vunpack.c.l.b16 %v123
    %v156 = vpack.c.b16 %v141, %v140
    %v157 = vpack.c.b16 %v143, %v142
    %v158 = vpack.c.b16 %v145, %v144
    %v159 = vpack.c.b16 %v147, %v146
    %v160 = vpack.c.b16 %v149, %v148
    %v161 = vpack.c.b16 %v151, %v150
    %v162 = vpack.c.b16 %v153, %v152
    %v163 = vpack.c.b16 %v155, %v154
    %172 = vmatprep.subr.bf16.mxu0 0
    %173 = vmatpush1.bf16.msra.mxu0 %v156
    %174 = vmatprep.subr.bf16.mxu0 0
    %175 = vmatpush1.bf16.msra.mxu0 %v157
    %176 = vmatprep.subr.bf16.mxu0 0
    %177 = vmatpush1.bf16.msra.mxu0 %v158
    %178 = vmatprep.subr.bf16.mxu0 0
    %179 = vmatpush1.bf16.msra.mxu0 %v159
    %180 = vmatprep.subr.bf16.mxu0 0
    %181 = vmatpush1.bf16.msra.mxu0 %v160
    %182 = vmatprep.subr.bf16.mxu0 0
    %183 = vmatpush1.bf16.msra.mxu0 %v161
    %184 = vmatprep.subr.bf16.mxu0 0
    %185 = vmatpush1.bf16.msra.mxu0 %v162
    %186 = vmatprep.subr.bf16.mxu0 0
    %187 = vmatpush1.bf16.msra.mxu0 %v163
    %188 = vmatprep.subr.bf16.mxu0 0
    %189 = vmatpush1.bf16.msra.mxu0 0
    %190 = vmatprep.subr.bf16.mxu0 0
    %191 = vmatpush1.bf16.msra.mxu0 0
    %192 = vmatprep.subr.bf16.mxu0 0
    %193 = vmatpush1.bf16.msra.mxu0 0
    %194 = vmatprep.subr.bf16.mxu0 0
    %195 = vmatpush1.bf16.msra.mxu0 0
    %196 = vmatprep.subr.bf16.mxu0 0
    %197 = vmatpush1.bf16.msra.mxu0 0
    %198 = vmatprep.subr.bf16.mxu0 0
    %199 = vmatpush1.bf16.msra.mxu0 0
    %200 = vmatprep.subr.bf16.mxu0 0
    %201 = vmatpush1.bf16.msra.mxu0 0
    %202 = vmatprep.subr.bf16.mxu0 0
    %203 = vmatpush1.bf16.msra.mxu0 0
    %204 = vmatprep.mubr.bf16.mxu0 0
    %205 = vmatmul.mubr.bf16.gmra.mrb[0].mxu0 %v107
    %v206 = vpop.f32.mrb[0].mxu0
    %v207 = vadd.f32 0.0, %v206
    %v208 = vpop.f32.mrb[0].mxu0
    %v209 = vpop.f32.mrb[0].mxu0
    %v210 = vpop.f32.mrb[0].mxu0
    %211 = vdwg.mxu0
    %v212 = vadd.f32 %v106, %v207
    %213 = vst [vmem:[#allocation2] sm:$0xff] %v212
    // Predicated region
    $region22: #{tpu_custom_call.1} parent=1 // pred_check
      %p214 = pneg %p39
    $region23: #{tpu_custom_call.1} parent=1 // pred_check_branch
      %216 = sbr.rel (%p214) target = $region25
    $region24: #{tpu_custom_call.1} parent=1 // pred_region
      %v217 = vld [vmem:[#allocation2] sm:$0xff]
      %v218 = vmul.f32 %v217, 0.125
      %219 = vst [vmem:[#allocation8] sm:$0xff] %v218
    $region25: #{tpu_custom_call.1} parent=1 // pred_fallthru
      _
    // Predicated region
    $region26: #{tpu_custom_call.1} parent=1 // pred_check
      _
    $region27: #{tpu_custom_call.1} parent=1 // pred_check_branch
      %221 = sbr.rel (0) target = $region29
    $region28: #{tpu_custom_call.1} parent=1 // pred_region
      %s223 = ssub.s32 128, 128
      %224 = vsyncadd [#allocation5], %s223
      %s226 = sshll.u32 [#allocation8], 4
      %s227 = int_to_ptr.vmem [resolvable:$true] %s226
      %229 = dma.vmem_to_hbm [thread:$0]  %s227, 128, %s2, [#allocation5]
    $region29: #{tpu_custom_call.1} parent=1 // pred_fallthru
      _
    // Predicated region
    $region30: #{tpu_custom_call.1} parent=1 // pred_check
      _
    $region31: #{tpu_custom_call.1} parent=1 // pred_check_branch
      %231 = sbr.rel (0) target = $region33
    $region32: #{tpu_custom_call.1} parent=1 // pred_region
      %232 = dma.done [#allocation5], 128
    $region33: #{tpu_custom_call.1} parent=1 // pred_fallthru
      _
    %233 = vsyncpa [#allocation4], 1
    %234 = vsyncpa [#allocation7], 1
    %235 = vsyncpa [#allocation5], 1

</llo_original>
